<compile_context>
chip_gen: v6e
topology: v6e:2x2x1
jax: 0.10.0
libtpu: 0.0.40
codegen_flags: <defaults>
</compile_context>

<pallas_src>
import jax
import jax.numpy as jnp
from jax.experimental import pallas as pl
from jax.experimental.pallas import tpu as pltpu

SUBLANE = 8      # f32 sublane height
OUT_DIM = 2      # module output features
OUT_PAD = 8      # output columns padded to one sublane group (not 128 -> 16x less HBM)
MAX_TB = 1024    # max batch-tile rows (good per-step amortization, tiny VMEM footprint)


def fused_affine_kernel(x_ref, w_ref, b_ref, o_ref):
    # One affine map per batch tile: (tb, K) @ (K, 8) + (1, 8) -> (tb, 8)
    o_ref[...] = (
        jnp.dot(x_ref[...], w_ref[...], preferred_element_type=jnp.float32)
        + b_ref[...]
    )


def _round_up(n, m):
    return (n + m - 1) // m * m


def prepare_test_net_params(params, num_layers):
    """Fold the activation-free Linear chain ONCE into a padded affine map.

    Call this once per parameter set and reuse (W_pad, b_pad) for every forward;
    this is the "cache the folded/padded params" optimization.
    """
    w1, b1, wm, bm, wo, bo = params
    hp = jax.lax.Precision.HIGHEST
    W = w1.astype(jnp.float32)   # (K, 5)
    b = b1.astype(jnp.float32)   # (1, 5)
    for i in range(num_layers):
        W = jnp.matmul(W, wm[i], precision=hp)
        b = jnp.matmul(b, wm[i], precision=hp) + bm[i]
    W = jnp.matmul(W, wo, precision=hp)          # (K, 2)
    b = jnp.matmul(b, wo, precision=hp) + bo     # (1, 2)
    K = W.shape[0]
    W_pad = jnp.zeros((K, OUT_PAD), jnp.float32).at[:, :OUT_DIM].set(W)
    b_pad = jnp.zeros((1, OUT_PAD), jnp.float32).at[:, :OUT_DIM].set(b)
    return W_pad, b_pad


def _choose_tile(B):
    """Pick (batch tile, padded batch).

    * tiny B (<= 8 rows): one grid step (the module's own B=1 forward).
    * otherwise: an EVEN number of grid steps so v7x's 2 TensorCores get equal
      work from the "parallel" batch axis, with tiles <= MAX_TB rows (big enough
      to amortize per-step overhead on single-TC v5e/v6e) and row padding bounded
      by the adaptive tile (no more B=520 -> 1024 blow-up).
    """
    B8 = _round_up(B, SUBLANE)
    if B8 <= SUBLANE:
        return B8, B8
    steps = 2 * pl.cdiv(B8, 2 * MAX_TB)          # even, >= 2
    tb = _round_up(pl.cdiv(B8, steps), SUBLANE)
    return tb, steps * tb


def _batched_affine(x2d, W_pad, b_pad):
    """x2d: (B, K) f32 -> (B, OUT_DIM) f32 via a single batched Pallas matmul."""
    B, K = x2d.shape
    tb, B_pad = _choose_tile(B)
    if B_pad != B:
        # Padded rows are zero; they yield b_eff in the output and are sliced off.
        x2d = jnp.zeros((B_pad, K), jnp.float32).at[:B, :].set(x2d)

    cost = pl.CostEstimate(
        flops=2 * B_pad * K * OUT_PAD,
        transcendentals=0,
        bytes_accessed=4 * (B_pad * K + K * OUT_PAD + OUT_PAD + B_pad * OUT_PAD),
    )

    out = pl.pallas_call(
        fused_affine_kernel,
        out_shape=jax.ShapeDtypeStruct((B_pad, OUT_PAD), jnp.float32),
        grid=(B_pad // tb,),
        in_specs=[
            pl.BlockSpec((tb, K), lambda i: (i, 0)),
            pl.BlockSpec((K, OUT_PAD), lambda i: (0, 0)),
            pl.BlockSpec((1, OUT_PAD), lambda i: (0, 0)),
        ],
        out_specs=pl.BlockSpec((tb, OUT_PAD), lambda i: (i, 0)),
        compiler_params=pltpu.CompilerParams(
            dimension_semantics=("parallel",),   # megacore-shard the batch axis
        ),
        cost_estimate=cost,
    )(x2d, W_pad, b_pad)
    # Slim slice: only B*32 bytes re-read (vs the old B*512-byte padded slab).
    return out[:B, :OUT_DIM]


@jax.jit
def test_net_forward(x, W_pad, b_pad):
    """Exact test_net.forward semantics: x.view(-1) -> output of shape (2,)."""
    K = W_pad.shape[0]
    x_flat = x.reshape(1, K).astype(jnp.float32)   # torch's x.view(-1)
    return _batched_affine(x_flat, W_pad, b_pad).reshape(OUT_DIM)


@jax.jit
def test_net_forward_batched(xb, W_pad, b_pad):
    """Throughput path: per-example test_net forward over a leading batch dim."""
    K = W_pad.shape[0]
    B = xb.shape[0]
    return _batched_affine(xb.reshape(B, K).astype(jnp.float32), W_pad, b_pad)


def init_params(key, num_layers, input_size):
    ks = jax.random.split(key, 6)
    # Weights stored as (in_features, out_features) == transpose of nn.Linear.weight.
    w1 = 0.1 * jax.random.normal(ks[0], (input_size, 5), jnp.float32)
    b1 = 0.1 * jax.random.normal(ks[1], (1, 5), jnp.float32)
    wm = 0.1 * jax.random.normal(ks[2], (num_layers, 5, 5), jnp.float32)
    bm = 0.1 * jax.random.normal(ks[3], (num_layers, 1, 5), jnp.float32)
    wo = 0.1 * jax.random.normal(ks[4], (5, 2), jnp.float32)
    bo = 0.1 * jax.random.normal(ks[5], (1, 2), jnp.float32)
    return w1, b1, wm, bm, wo, bo


def reference_forward(x, params, num_layers):
    """Layer-by-layer reference (same order of ops as the PyTorch module)."""
    w1, b1, wm, bm, wo, bo = params
    hp = jax.lax.Precision.HIGHEST
    h = x.reshape(1, -1).astype(jnp.float32)
    h = jnp.matmul(h, w1, precision=hp) + b1
    for i in range(num_layers):
        h = jnp.matmul(h, wm[i], precision=hp) + bm[i]
    h = jnp.matmul(h, wo, precision=hp) + bo
    return h.reshape(OUT_DIM)


if __name__ == "__main__":
    num_layers = 3
    input_size = 32  # x.view(-1) must have exactly input_size elements

    key = jax.random.PRNGKey(0)
    k_x, k_p, k_b, k_c = jax.random.split(key, 4)
    params = init_params(k_p, num_layers, input_size)

    # Fold + pad ONCE; every forward below reuses these cached slabs.
    W_pad, b_pad = jax.block_until_ready(prepare_test_net_params(params, num_layers))

    # 1) Single example — exactly the PyTorch module's forward semantics (B=1).
    x = jax.random.normal(k_x, (2, 4, 4), jnp.float32)  # 2*4*4 == input_size
    out = jax.block_until_ready(test_net_forward(x, W_pad, b_pad))
    ref = reference_forward(x, params, num_layers)
    assert out.shape == (OUT_DIM,)
    assert jnp.allclose(out, ref, atol=1e-4, rtol=1e-4), (out, ref)

    # 2) Batched path — B=1024 runs as 2 grid steps of 512 rows (even split for
    #    v7x's two TensorCores; single-TC chips just loop twice).
    B = 1024
    xb = jax.random.normal(k_b, (B, 2, 4, 4), jnp.float32)
    outb = jax.block_until_ready(test_net_forward_batched(xb, W_pad, b_pad))
    refb = jax.vmap(lambda xi: reference_forward(xi, params, num_layers))(xb)
    assert outb.shape == (B, OUT_DIM)
    assert jnp.allclose(outb, refb, atol=1e-4, rtol=1e-4)

    # 3) Awkward batch size — exercises the adaptive tile + bounded row padding
    #    (B=132 -> 2 steps of 72 rows, only 12 padded rows, all sliced off).
    B2 = 132
    xc = jax.random.normal(k_c, (B2, 2, 4, 4), jnp.float32)
    outc = jax.block_until_ready(test_net_forward_batched(xc, W_pad, b_pad))
    refc = jax.vmap(lambda xi: reference_forward(xi, params, num_layers))(xc)
    assert outc.shape == (B2, OUT_DIM)
    assert jnp.allclose(outc, refc, atol=1e-4, rtol=1e-4)

    print("KERNEL_OK")
</pallas_src>

<mosaic_0001>
module attributes {stable_mosaic.version = 11 : i64} {
  func.func @fused_affine_kernel(%arg0: i32, %arg1: memref<8x32xf32, #tpu.memory_space<vmem>>, %arg2: memref<32x8xf32, #tpu.memory_space<vmem>>, %arg3: memref<1x8xf32, #tpu.memory_space<vmem>>, %arg4: memref<8x8xf32, #tpu.memory_space<vmem>>) attributes {dimension_semantics = [#tpu.dimension_semantics<parallel>], iteration_bounds = array<i64: 1>, scalar_prefetch = 0 : i64, scratch_operands = 0 : i64, tpu.core_type = #tpu.core_type<tc>, window_params = [{transform_indices = @transform_0, window_bounds = array<i64: 8, 32>}, {pipeline_mode = #tpu.pipeline_mode<synchronous>, transform_indices = @transform_1, window_bounds = array<i64: 32, 8>}, {pipeline_mode = #tpu.pipeline_mode<synchronous>, transform_indices = @transform_2, window_bounds = array<i64: 1, 8>}, {transform_indices = @transform_3, window_bounds = array<i64: 8, 8>}]} {
    %c0 = arith.constant 0 : index
    %c0_0 = arith.constant 0 : index
    %0 = vector.load %arg1[%c0, %c0_0] : memref<8x32xf32, #tpu.memory_space<vmem>>, vector<8x32xf32>
    %c0_1 = arith.constant 0 : index
    %c0_2 = arith.constant 0 : index
    %1 = vector.load %arg2[%c0_1, %c0_2] : memref<32x8xf32, #tpu.memory_space<vmem>>, vector<32x8xf32>
    %cst = arith.constant dense<0.000000e+00> : vector<8x8xf32>
    %2 = tpu.matmul %0, %1, %cst {dimension_numbers = #tpu.dot_dimension_numbers<[1], [0], [0], [1], [0, 0, 1, 1], [], []>} : vector<8x32xf32>, vector<32x8xf32>, vector<8x8xf32> -> vector<8x8xf32>
    %c0_3 = arith.constant 0 : index
    %c0_4 = arith.constant 0 : index
    %3 = vector.load %arg3[%c0_3, %c0_4] : memref<1x8xf32, #tpu.memory_space<vmem>>, vector<1x8xf32>
    %4 = vector.broadcast %3 : vector<1x8xf32> to vector<8x8xf32>
    %5 = arith.addf %2, %4 : vector<8x8xf32>
    %c0_5 = arith.constant 0 : index
    %c0_6 = arith.constant 0 : index
    %6 = vector.load %arg4[%c0_5, %c0_6] : memref<8x8xf32, #tpu.memory_space<vmem>>, vector<8x8xf32>
    tpu.vector_store %arg4[%c0_5, %c0_6], %5 {strides = array<i32>} : memref<8x8xf32, #tpu.memory_space<vmem>>, vector<8x8xf32>,
    return
  }
  func.func @transform_0(%arg0: i32) -> (i32, i32) {
    %c0_i32 = arith.constant 0 : i32
    %c0_i32_0 = arith.constant 0 : i32
    return %arg0, %c0_i32 : i32, i32
  }
  func.func @transform_1(%arg0: i32) -> (i32, i32) {
    %c0_i32 = arith.constant 0 : i32
    %c0_i32_0 = arith.constant 0 : i32
    %c0_i32_1 = arith.constant 0 : i32
    return %c0_i32, %c0_i32_0 : i32, i32
  }
  func.func @transform_2(%arg0: i32) -> (i32, i32) {
    %c0_i32 = arith.constant 0 : i32
    %c0_i32_0 = arith.constant 0 : i32
    %c0_i32_1 = arith.constant 0 : i32
    return %c0_i32, %c0_i32_0 : i32, i32
  }
  func.func @transform_3(%arg0: i32) -> (i32, i32) {
    %c0_i32 = arith.constant 0 : i32
    %c0_i32_0 = arith.constant 0 : i32
    return %arg0, %c0_i32 : i32, i32
  }
}

</mosaic_0001>

<llo_original>
// kernel: test_net_forward.1
$region0: #{test_net_forward.1}
  #allocation0 [shape = 'u32[]', space=smem, size = 0x4, offset = 0x4, fixed_abs, tag = 'smem constant byte address 0x4 - core index']
  #allocation1 [shape = 'u32[144,128]{1,0:T(1,128)}', space=vmem, size = 0x12000, scoped, tag = 'internal scratch']
  %s0 = inlined_call_operand.vmem [shape: f32[8,32], index: 0, kind: input, shape index: {}]
  %s1 = inlined_call_operand.vmem [shape: f32[32,8], index: 1, kind: input, shape index: {}]
  %s2 = inlined_call_operand.vmem [shape: f32[1,8], index: 2, kind: input, shape index: {}]
  %s3 = inlined_call_operand.vmem [shape: f32[8,8], index: 3, kind: output, shape index: {}]
  %s4 = sld [smem:[#allocation0]]
  $region22: #{test_net_forward.1} parent=0
    _
  %s6 = ssub.s32 1, %s4
  %s7 = scalar_select 0, %s6, %s4
  // Predicated region
  $region2: #{test_net_forward.1} parent=0 // pred_check
    _
  $region3: #{test_net_forward.1} parent=0 // pred_check_branch
    %9 = sbr.rel (0) target = $region5
  $region4: #{test_net_forward.1} parent=0 // pred_region
    _
  $region5: #{test_net_forward.1} parent=0 // pred_fallthru
    _
  // Predicated region
  $region6: #{test_net_forward.1} parent=0 // pred_check
    _
  $region7: #{test_net_forward.1} parent=0 // pred_check_branch
    %11 = sbr.rel (0) target = $region9
  $region8: #{test_net_forward.1} parent=0 // pred_region
    _
  $region9: #{test_net_forward.1} parent=0 // pred_fallthru
    _
  // Predicated region
  $region10: #{test_net_forward.1} parent=0 // pred_check
    _
  $region11: #{test_net_forward.1} parent=0 // pred_check_branch
    %13 = sbr.rel (0) target = $region13
  $region12: #{test_net_forward.1} parent=0 // pred_region
    _
  $region13: #{test_net_forward.1} parent=0 // pred_fallthru
    _
  %v14 = vld [vmem:[%s0] sm:$0xff]
  %v15 = vld [vmem:[%s1] sm:$0xff]
  %v16 = vld [vmem:[%s1 + $0x8] sm:$0xff]
  %v17 = vld [vmem:[%s1 + $0x10] sm:$0xff]
  %v18 = vld [vmem:[%s1 + $0x18] sm:$0xff]
  %v19 = vld [vmem:[%s2] sm:$0x1]
  %v21 = vlaneseq
  %v22 = vshrl.u32 %v21, 7
  %v23 = vsub.s32 0, %v22
  %v24 = vrot.slane %v19, %v23
  %vm26 = vcmask 261120
  %v28 = vsel %vm26, %v14, 0
  %30 = vmatprep.subr.mxu0 0.0
  %31 = vmatpush1.msra.mxu0 0.0
  %32 = vmatprep.subr.mxu0 0.0
  %33 = vmatpush1.msra.mxu0 0.0
  %34 = vmatprep.subr.mxu0 0.0
  %35 = vmatpush1.msra.mxu0 0.0
  %36 = vmatprep.subr.mxu0 0.0
  %37 = vmatpush1.msra.mxu0 0.0
  %38 = vmatprep.subr.mxu0 0.0
  %39 = vmatpush1.msra.mxu0 0.0
  %40 = vmatprep.subr.mxu0 0.0
  %41 = vmatpush1.msra.mxu0 0.0
  %42 = vmatprep.subr.mxu0 0.0
  %43 = vmatpush1.msra.mxu0 0.0
  %44 = vmatprep.subr.mxu0 0.0
  %45 = vmatpush1.msra.mxu0 0.0
  %46 = vmatprep.subr.mxu0 0.0
  %47 = vmatpush1.msra.mxu0 0.0
  %48 = vmatprep.subr.mxu0 0.0
  %49 = vmatpush1.msra.mxu0 0.0
  %50 = vmatprep.subr.mxu0 0.0
  %51 = vmatpush1.msra.mxu0 0.0
  %52 = vmatprep.subr.mxu0 0.0
  %53 = vmatpush1.msra.mxu0 0.0
  %54 = vmatprep.subr.mxu0 0.0
  %55 = vmatpush1.msra.mxu0 %v18
  %56 = vmatprep.subr.mxu0 0.0
  %57 = vmatpush1.msra.mxu0 %v17
  %58 = vmatprep.subr.mxu0 0.0
  %59 = vmatpush1.msra.mxu0 %v16
  %60 = vmatprep.subr.mxu0 0.0
  %61 = vmatpush1.msra.mxu0 %v15
  %62 = vmatprep.subr.mxu0 0.0
  %63 = vmatpush2.msra.mxu0 0.0
  %64 = vmatprep.subr.mxu0 0.0
  %65 = vmatpush2.msra.mxu0 0.0
  %66 = vmatprep.subr.mxu0 0.0
  %67 = vmatpush2.msra.mxu0 0.0
  %68 = vmatprep.subr.mxu0 0.0
  %69 = vmatpush2.msra.mxu0 0.0
  %70 = vmatprep.subr.mxu0 0.0
  %71 = vmatpush2.msra.mxu0 0.0
  %72 = vmatprep.subr.mxu0 0.0
  %73 = vmatpush2.msra.mxu0 0.0
  %74 = vmatprep.subr.mxu0 0.0
  %75 = vmatpush2.msra.mxu0 0.0
  %76 = vmatprep.subr.mxu0 0.0
  %77 = vmatpush2.msra.mxu0 0.0
  %78 = vmatprep.subr.mxu0 0.0
  %79 = vmatpush2.msra.mxu0 0.0
  %80 = vmatprep.subr.mxu0 0.0
  %81 = vmatpush2.msra.mxu0 0.0
  %82 = vmatprep.subr.mxu0 0.0
  %83 = vmatpush2.msra.mxu0 0.0
  %84 = vmatprep.subr.mxu0 0.0
  %85 = vmatpush2.msra.mxu0 0.0
  %86 = vmatprep.subr.mxu0 0.0
  %87 = vmatpush2.msra.mxu0 0.0
  %88 = vmatprep.subr.mxu0 0.0
  %89 = vmatpush2.msra.mxu0 0.0
  %90 = vmatprep.subr.mxu0 0.0
  %91 = vmatpush2.msra.mxu0 0.0
  %92 = vmatprep.subr.mxu0 0.0
  %93 = vmatpush2.msra.mxu0 0.0
  %94 = vmatprep.mubr.f32.mxu0 0.0
  %95 = vmatmul.mubr.f32.gmra.mxu0 %v28
  %v96 = vpop.f32.mrf.mxu0
  %v97 = vadd.f32 %v24, %v96
  %v98 = vpop.f32.mrf.mxu0
  %99 = vdwg.mxu0
  %vm100 = vcmask 64512
  %101 = vst.msk [vmem:[%s3] sm:$0xff] %vm100, %v97
  // Predicated region
  $region14: #{test_net_forward.1} parent=0 // pred_check
    _
  $region15: #{test_net_forward.1} parent=0 // pred_check_branch
    %103 = sbr.rel (0) target = $region17
  $region16: #{test_net_forward.1} parent=0 // pred_region
    _
  $region17: #{test_net_forward.1} parent=0 // pred_fallthru
    _
  // Predicated region
  $region18: #{test_net_forward.1} parent=0 // pred_check
    _
  $region19: #{test_net_forward.1} parent=0 // pred_check_branch
    %105 = sbr.rel (0) target = $region21
  $region20: #{test_net_forward.1} parent=0 // pred_region
    _
  $region21: #{test_net_forward.1} parent=0 // pred_fallthru
    _

</llo_original>
